<compile_context>
chip_gen: v7x
topology: tpu7x:2x2x1
jax: 0.10.0
libtpu: 0.0.40
codegen_flags: <defaults>
</compile_context>

<pallas_src>
import functools

import jax
import jax.numpy as jnp
from jax import lax
from jax.experimental import pallas as pl
from jax.experimental.pallas import tpu as pltpu

_CHUNK = 128  # rows per inner chunk == lanes per output row


def _qnet_fused_kernel(*refs, n_hidden):
    """Fused MLP over one batch tile, processed in 128-row chunks.

    refs = (x_ref, w0, b0, w1, b1, ..., w_last_T, o_ref)
      x_ref:      (TB, Din)           activation tile (param dtype, e.g. bf16)
      w_i, b_i:   (in, out), (1, out) hidden layers (bias + ReLU)
      w_last_T:   (1, H_last)         final bias-free layer, pre-transposed
      o_ref:      (TB//128, 128)      lane-dense Q-values (f32)
    """
    x_ref = refs[0]
    o_ref = refs[-1]
    wl_t_ref = refs[-2]
    hidden_refs = refs[1:-2]

    n_chunks = o_ref.shape[0]  # TB // 128

    # Hoist the (tiny) weight loads and the f32 bias casts out of the chunk
    # loop.  Biases stay (1, out) — the broadcast happens inside the add so we
    # don't pin (chunk, out) f32 slabs in vregs across the whole loop.
    ws, bs = [], []
    for li in range(n_hidden):
        ws.append(hidden_refs[2 * li][...])
        bs.append(hidden_refs[2 * li + 1][...].astype(jnp.float32))
    wl_t = wl_t_ref[...]

    def body(c, carry):
        r0 = pl.multiple_of(c * _CHUNK, _CHUNK)
        h = x_ref[pl.ds(r0, _CHUNK), :]          # (chunk, Din), param dtype
        h_f32 = None
        for li in range(n_hidden):
            # MXU matmul with f32 accumulation; bias + ReLU epilogue in f32.
            acc = jnp.dot(h, ws[li], preferred_element_type=jnp.float32)
            h_f32 = jnp.maximum(acc + bs[li], 0.0)
            h = h_f32.astype(ws[li].dtype)       # bf16 operand for next layer
        if h_f32 is None:                        # degenerate: no hidden layers
            h_f32 = h.astype(jnp.float32)
        # Final bias-free layer, computed lane-major:
        #   (1, H) @ (H, chunk) -> (1, chunk)  — result already lane-dense.
        h_t = h_f32.T.astype(wl_t.dtype)         # XLU transpose (idle slot)
        q = jnp.dot(wl_t, h_t, preferred_element_type=jnp.float32)
        o_ref[pl.ds(c, 1), :] = q.astype(o_ref.dtype)
        return carry

    lax.fori_loop(0, n_chunks, body, 0, unroll=True)


def _round_up(n, m):
    return ((n + m - 1) // m) * m


def qnet_forward(x, params, *, batch_tile=1024, min_grid_steps=4):
    """Forward pass of QNet as a single fused pallas_call.

    params: list of (w, b); w is (in, out); b is (1, out) for hidden layers
            and None for the bias-free final layer (out dim 1).
    Returns f32 Q-values of shape (B, 1).
    """
    assert batch_tile % 128 == 0 and batch_tile >= 128
    B, Din = x.shape
    hidden = params[:-1]
    w_last, b_last = params[-1]
    assert b_last is None and w_last.shape[-1] == 1
    param_dtype = w_last.dtype
    w_last_t = w_last.reshape(1, -1)             # (1, H_last)

    # Stream activations in the parameter dtype (halves the x DMA for bf16).
    x = x.astype(param_dtype)

    # Batch tile: multiple of 128 (lane-dense output rows), large to amortize
    # the ~0.35us per-grid-step overhead, but capped so the grid has at least
    # `min_grid_steps` steps when the batch allows (v7x megacore sharding).
    TB = _round_up(pl.cdiv(max(B, 1), min_grid_steps), 128)
    TB = max(128, min(TB, batch_tile))
    Bp = _round_up(B, TB)
    if Bp != B:
        # Padded rows carry bias-propagated garbage; they are sliced off below
        # and never reduced over.
        x = jnp.pad(x, ((0, Bp - B), (0, 0)))
    grid_steps = Bp // TB
    rows = TB // _CHUNK

    # Activations tiled over the batch grid; tiny weights/biases are resident
    # (constant block index -> no re-DMA across steps).  No dead bias operand
    # for the final layer.
    operands = [x]
    in_specs = [pl.BlockSpec((TB, Din), lambda i: (i, 0))]
    for w, b in hidden:
        operands += [w, b]
        in_specs += [pl.BlockSpec(w.shape, lambda i: (0, 0)),
                     pl.BlockSpec(b.shape, lambda i: (0, 0))]
    operands.append(w_last_t)
    in_specs.append(pl.BlockSpec(w_last_t.shape, lambda i: (0, 0)))

    kernel = functools.partial(_qnet_fused_kernel, n_hidden=len(hidden))
    out = pl.pallas_call(
        kernel,
        out_shape=jax.ShapeDtypeStruct((grid_steps, rows, 128), jnp.float32),
        grid=(grid_steps,),
        in_specs=in_specs,
        out_specs=pl.BlockSpec((None, rows, 128), lambda i: (i, 0, 0)),
        compiler_params=pltpu.CompilerParams(
            # Batch tiles are independent -> shard across TCs on v7x megacore.
            dimension_semantics=("parallel",),
        ),
    )(*operands)
    # Lane-dense slab -> (B, 1): row-major flatten of (grid, TB//128, 128) is
    # exactly batch order.
    return out.reshape(Bp, 1)[:B]


def init_qnet_params(key, net_arch, dtype=jnp.bfloat16):
    """Deterministic init mirroring nn.Linear defaults (U(-1/sqrt(fan_in), +)).

    Returns a list of (w, b); b=None for the bias-free final layer.
    """
    assert net_arch[-1] == 1
    params = []
    n_layers = len(net_arch)
    for n in range(n_layers - 1):
        fan_in, fan_out = net_arch[n], net_arch[n + 1]
        key, kw, kb = jax.random.split(key, 3)
        bound = 1.0 / (fan_in ** 0.5)
        w = jax.random.uniform(kw, (fan_in, fan_out), jnp.float32, -bound, bound)
        if n != n_layers - 2:  # hidden layers have bias; last Linear is bias=False
            b = jax.random.uniform(kb, (1, fan_out), jnp.float32, -bound, bound)
            b = b.astype(dtype)
        else:
            b = None
        params.append((w.astype(dtype), b))
    return params


def qnet_forward_ref(x, params):
    """Pure-JAX reference with the same operand-dtype casts as the kernel.

    Operands are cast to the parameter dtype before each matmul; accumulation
    and the bias/ReLU epilogue are f32.  Returns f32 (B, 1).
    """
    h = x
    n = len(params)
    for i, (w, b) in enumerate(params):
        y = jnp.dot(h.astype(w.dtype), w, preferred_element_type=jnp.float32)
        if b is not None:
            y = y + b.astype(jnp.float32)
        if i != n - 1:
            y = jnp.maximum(y, 0.0)
        h = y
    return h


if __name__ == "__main__":
    # QNet(net_arch=[32, 64, 64, 1], activation_fn=nn.ReLU)
    net_arch = [32, 64, 64, 1]
    key = jax.random.PRNGKey(0)
    key_p, key_a, key_b, key_c = jax.random.split(key, 4)

    params = init_qnet_params(key_p, net_arch, dtype=jnp.bfloat16)

    # 1) Tiny batch: one grid step, one 128-row chunk (batch padded 8 -> 128).
    x1 = jax.random.normal(key_a, (8, net_arch[0]), jnp.float32)
    o1 = jax.block_until_ready(qnet_forward(x1, params))
    r1 = qnet_forward_ref(x1, params)
    assert o1.shape == (8, 1), o1.shape
    assert jnp.allclose(o1, r1, atol=1e-3, rtol=1e-3), (o1, r1)

    # 2) Ragged batch over several grid steps (padding + parallel grid path).
    x2 = jax.random.normal(key_b, (300, net_arch[0]), jnp.float32)
    o2 = jax.block_until_ready(
        qnet_forward(x2, params, batch_tile=128, min_grid_steps=2))
    r2 = qnet_forward_ref(x2, params)
    assert o2.shape == (300, 1), o2.shape
    assert jnp.allclose(o2, r2, atol=1e-3, rtol=1e-3), (o2, r2)

    # 3) Multi-chunk inner loop within a single grid step (TB=512 -> 4 chunks).
    x3 = jax.random.normal(key_c, (512, net_arch[0]), jnp.float32)
    o3 = jax.block_until_ready(
        qnet_forward(x3, params, batch_tile=512, min_grid_steps=1))
    r3 = qnet_forward_ref(x3, params)
    assert o3.shape == (512, 1), o3.shape
    assert jnp.allclose(o3, r3, atol=1e-3, rtol=1e-3), (o3, r3)

    print("KERNEL_OK")
</pallas_src>

<mosaic_0001>
module attributes {stable_mosaic.version = 11 : i64} {
  func.func @_qnet_fused_kernel(%arg0: i32, %arg1: memref<128x32xbf16, #tpu.memory_space<vmem>>, %arg2: memref<32x64xbf16, #tpu.memory_space<vmem>>, %arg3: memref<1x64xbf16, #tpu.memory_space<vmem>>, %arg4: memref<64x64xbf16, #tpu.memory_space<vmem>>, %arg5: memref<1x64xbf16, #tpu.memory_space<vmem>>, %arg6: memref<1x64xbf16, #tpu.memory_space<vmem>>, %arg7: memref<1x1x128xf32, #tpu.memory_space<vmem>>) attributes {dimension_semantics = [#tpu.dimension_semantics<parallel>], iteration_bounds = array<i64: 1>, scalar_prefetch = 0 : i64, scratch_operands = 0 : i64, tpu.core_type = #tpu.core_type<tc>, window_params = [{transform_indices = @transform_0, window_bounds = array<i64: 128, 32>}, {pipeline_mode = #tpu.pipeline_mode<synchronous>, transform_indices = @transform_1, window_bounds = array<i64: 32, 64>}, {pipeline_mode = #tpu.pipeline_mode<synchronous>, transform_indices = @transform_2, window_bounds = array<i64: 1, 64>}, {pipeline_mode = #tpu.pipeline_mode<synchronous>, transform_indices = @transform_3, window_bounds = array<i64: 64, 64>}, {pipeline_mode = #tpu.pipeline_mode<synchronous>, transform_indices = @transform_4, window_bounds = array<i64: 1, 64>}, {pipeline_mode = #tpu.pipeline_mode<synchronous>, transform_indices = @transform_5, window_bounds = array<i64: 1, 64>}, {transform_indices = @transform_6, window_bounds = array<i64: 1, 1, 128>}]} {
    %c0 = arith.constant 0 : index
    %c0_0 = arith.constant 0 : index
    %0 = vector.load %arg2[%c0, %c0_0] : memref<32x64xbf16, #tpu.memory_space<vmem>>, vector<32x64xbf16>
    %c0_1 = arith.constant 0 : index
    %c0_2 = arith.constant 0 : index
    %1 = vector.load %arg3[%c0_1, %c0_2] : memref<1x64xbf16, #tpu.memory_space<vmem>>, vector<1x64xbf16>
    %2 = arith.extf %1 : vector<1x64xbf16> to vector<1x64xf32>
    %c0_3 = arith.constant 0 : index
    %c0_4 = arith.constant 0 : index
    %3 = vector.load %arg4[%c0_3, %c0_4] : memref<64x64xbf16, #tpu.memory_space<vmem>>, vector<64x64xbf16>
    %c0_5 = arith.constant 0 : index
    %c0_6 = arith.constant 0 : index
    %4 = vector.load %arg5[%c0_5, %c0_6] : memref<1x64xbf16, #tpu.memory_space<vmem>>, vector<1x64xbf16>
    %5 = arith.extf %4 : vector<1x64xbf16> to vector<1x64xf32>
    %c0_7 = arith.constant 0 : index
    %c0_8 = arith.constant 0 : index
    %6 = vector.load %arg6[%c0_7, %c0_8] : memref<1x64xbf16, #tpu.memory_space<vmem>>, vector<1x64xbf16>
    %c0_i32 = arith.constant 0 : i32
    %c128_i32 = arith.constant 128 : i32
    %7 = arith.muli %c0_i32, %c128_i32 : i32
    %8 = tpu.assume_multiple %7, 128 : i32
    %9 = arith.index_cast %8 : i32 to index
    %c0_9 = arith.constant 0 : index
    %10 = vector.load %arg1[%9, %c0_9] : memref<128x32xbf16, #tpu.memory_space<vmem>>, vector<128x32xbf16>
    %cst = arith.constant dense<0.000000e+00> : vector<128x64xf32>
    %11 = tpu.matmul %10, %0, %cst {dimension_numbers = #tpu.dot_dimension_numbers<[1], [0], [0], [1], [0, 0, 1, 1], [], []>} : vector<128x32xbf16>, vector<32x64xbf16>, vector<128x64xf32> -> vector<128x64xf32>
    %12 = vector.broadcast %2 : vector<1x64xf32> to vector<128x64xf32>
    %13 = arith.addf %11, %12 : vector<128x64xf32>
    %cst_10 = arith.constant 0.000000e+00 : f32
    %14 = vector.broadcast %cst_10 : f32 to vector<128x64xf32>
    %15 = arith.maximumf %13, %14 : vector<128x64xf32>
    %16 = arith.truncf %15 : vector<128x64xf32> to vector<128x64xbf16>
    %cst_11 = arith.constant dense<0.000000e+00> : vector<128x64xf32>
    %17 = tpu.matmul %16, %3, %cst_11 {dimension_numbers = #tpu.dot_dimension_numbers<[1], [0], [0], [1], [0, 0, 1, 1], [], []>} : vector<128x64xbf16>, vector<64x64xbf16>, vector<128x64xf32> -> vector<128x64xf32>
    %18 = vector.broadcast %5 : vector<1x64xf32> to vector<128x64xf32>
    %19 = arith.addf %17, %18 : vector<128x64xf32>
    %cst_12 = arith.constant 0.000000e+00 : f32
    %20 = vector.broadcast %cst_12 : f32 to vector<128x64xf32>
    %21 = arith.maximumf %19, %20 : vector<128x64xf32>
    %22 = tpu.transpose %21, [1, 0] : vector<128x64xf32> -> vector<64x128xf32>
    %23 = arith.truncf %22 : vector<64x128xf32> to vector<64x128xbf16>
    %cst_13 = arith.constant dense<0.000000e+00> : vector<1x128xf32>
    %24 = tpu.matmul %6, %23, %cst_13 {dimension_numbers = #tpu.dot_dimension_numbers<[1], [0], [0], [1], [0, 0, 1, 1], [], []>} : vector<1x64xbf16>, vector<64x128xbf16>, vector<1x128xf32> -> vector<1x128xf32>
    %c0_14 = arith.constant 0 : index
    %25 = arith.index_cast %c0_i32 : i32 to index
    %c0_15 = arith.constant 0 : index
    %26 = vector.load %arg7[%c0_14, %25, %c0_15] : memref<1x1x128xf32, #tpu.memory_space<vmem>>, vector<1x1x128xf32>
    %27 = vector.shape_cast %26 : vector<1x1x128xf32> to vector<1x128xf32>
    %28 = vector.shape_cast %24 : vector<1x128xf32> to vector<1x1x128xf32>
    tpu.vector_store %arg7[%c0_14, %25, %c0_15], %28 {strides = array<i32>} : memref<1x1x128xf32, #tpu.memory_space<vmem>>, vector<1x1x128xf32>,
    %c1_i32 = arith.constant 1 : i32
    return
  }
  func.func @transform_0(%arg0: i32) -> (i32, i32) {
    %c0_i32 = arith.constant 0 : i32
    %c0_i32_0 = arith.constant 0 : i32
    return %arg0, %c0_i32 : i32, i32
  }
  func.func @transform_1(%arg0: i32) -> (i32, i32) {
    %c0_i32 = arith.constant 0 : i32
    %c0_i32_0 = arith.constant 0 : i32
    %c0_i32_1 = arith.constant 0 : i32
    return %c0_i32, %c0_i32_0 : i32, i32
  }
  func.func @transform_2(%arg0: i32) -> (i32, i32) {
    %c0_i32 = arith.constant 0 : i32
    %c0_i32_0 = arith.constant 0 : i32
    %c0_i32_1 = arith.constant 0 : i32
    return %c0_i32, %c0_i32_0 : i32, i32
  }
  func.func @transform_3(%arg0: i32) -> (i32, i32) {
    %c0_i32 = arith.constant 0 : i32
    %c0_i32_0 = arith.constant 0 : i32
    %c0_i32_1 = arith.constant 0 : i32
    return %c0_i32, %c0_i32_0 : i32, i32
  }
  func.func @transform_4(%arg0: i32) -> (i32, i32) {
    %c0_i32 = arith.constant 0 : i32
    %c0_i32_0 = arith.constant 0 : i32
    %c0_i32_1 = arith.constant 0 : i32
    return %c0_i32, %c0_i32_0 : i32, i32
  }
  func.func @transform_5(%arg0: i32) -> (i32, i32) {
    %c0_i32 = arith.constant 0 : i32
    %c0_i32_0 = arith.constant 0 : i32
    %c0_i32_1 = arith.constant 0 : i32
    return %c0_i32, %c0_i32_0 : i32, i32
  }
  func.func @transform_6(%arg0: i32) -> (i32, i32, i32) {
    %c0_i32 = arith.constant 0 : i32
    %c0_i32_0 = arith.constant 0 : i32
    %c0_i32_1 = arith.constant 0 : i32
    return %arg0, %c0_i32, %c0_i32_0 : i32, i32, i32
  }
}

</mosaic_0001>

<llo_original>
// kernel: tpu_custom_call.1
$region0: #{tpu_custom_call.1}
  #allocation0 [shape = 'u32[]', space=smem, size = 0x4, offset = 0x4, fixed_abs, tag = 'smem constant byte address 0x4 - core index']
  #allocation1 [shape = 'u32[144,128]{1,0:T(1,128)}', space=vmem, size = 0x12000, scoped, tag = 'internal scratch']
  %s0 = inlined_call_operand.vmem [shape: bf16[128,32], index: 0, kind: input, shape index: {}]
  %s1 = inlined_call_operand.vmem [shape: bf16[32,64], index: 1, kind: input, shape index: {}]
  %s2 = inlined_call_operand.vmem [shape: bf16[1,64], index: 2, kind: input, shape index: {}]
  %s3 = inlined_call_operand.vmem [shape: bf16[64,64], index: 3, kind: input, shape index: {}]
  %s4 = inlined_call_operand.vmem [shape: bf16[1,64], index: 4, kind: input, shape index: {}]
  %s5 = inlined_call_operand.vmem [shape: bf16[1,64], index: 5, kind: input, shape index: {}]
  %s6 = inlined_call_operand.hbm [shape: f32[1,1,128], index: 6, kind: output, shape index: {}]
  %s7 = sld [smem:[#allocation0]]
  $region34: #{tpu_custom_call.1} parent=0
    _
  %s9 = ssub.s32 1, %s7
  %s10 = scalar_select 0, %s9, %s7
  $region1: #{tpu_custom_call.1} parent=0
    #allocation2 [shape = 'u8[512]{0}', space=vmem, size = 0x400, scoped, tag = 'output window, operand 0, single buffered']
    #allocation3 [shape = 's32[1]{0}', space=sflag, size = 0x4, scoped, tag = 'scoped memory for tpu_custom_call.1']
    %11 = vsyncpa [#allocation3], 0
    // Predicated region
    $region2: #{tpu_custom_call.1} parent=1 // pred_check
      _
    $region3: #{tpu_custom_call.1} parent=1 // pred_check_branch
      %13 = sbr.rel (0) target = $region5
    $region4: #{tpu_custom_call.1} parent=1 // pred_region
      _
    $region5: #{tpu_custom_call.1} parent=1 // pred_fallthru
      _
    // Predicated region
    $region6: #{tpu_custom_call.1} parent=1 // pred_check
      _
    $region7: #{tpu_custom_call.1} parent=1 // pred_check_branch
      %15 = sbr.rel (0) target = $region9
    $region8: #{tpu_custom_call.1} parent=1 // pred_region
      _
    $region9: #{tpu_custom_call.1} parent=1 // pred_fallthru
      _
    // Predicated region
    $region10: #{tpu_custom_call.1} parent=1 // pred_check
      _
    $region11: #{tpu_custom_call.1} parent=1 // pred_check_branch
      %17 = sbr.rel (0) target = $region13
    $region12: #{tpu_custom_call.1} parent=1 // pred_region
      _
    $region13: #{tpu_custom_call.1} parent=1 // pred_fallthru
      _
    // Predicated region
    $region14: #{tpu_custom_call.1} parent=1 // pred_check
      _
    $region15: #{tpu_custom_call.1} parent=1 // pred_check_branch
      %19 = sbr.rel (0) target = $region17
    $region16: #{tpu_custom_call.1} parent=1 // pred_region
      _
    $region17: #{tpu_custom_call.1} parent=1 // pred_fallthru
      _
    // Predicated region
    $region18: #{tpu_custom_call.1} parent=1 // pred_check
      _
    $region19: #{tpu_custom_call.1} parent=1 // pred_check_branch
      %21 = sbr.rel (0) target = $region21
    $region20: #{tpu_custom_call.1} parent=1 // pred_region
      _
    $region21: #{tpu_custom_call.1} parent=1 // pred_fallthru
      _
    // Predicated region
    $region22: #{tpu_custom_call.1} parent=1 // pred_check
      _
    $region23: #{tpu_custom_call.1} parent=1 // pred_check_branch
      %23 = sbr.rel (0) target = $region25
    $region24: #{tpu_custom_call.1} parent=1 // pred_region
      _
    $region25: #{tpu_custom_call.1} parent=1 // pred_fallthru
      _
    %v25 = vld [vmem:[%s1] sm:$0xf]
    %v26 = vld [vmem:[%s1 + $0x4] sm:$0xf]
    %v27 = vld [vmem:[%s1 + $0x8] sm:$0xf]
    %v28 = vld [vmem:[%s1 + $0xc] sm:$0xf]
    %v29 = vld [vmem:[%s2] sm:$0x1]
    %v30 = vunpack.c.l.bf16 %v29
    %v31 = vld [vmem:[%s3] sm:$0xf]
    %v32 = vld [vmem:[%s3 + $0x4] sm:$0xf]
    %v33 = vld [vmem:[%s3 + $0x8] sm:$0xf]
    %v34 = vld [vmem:[%s3 + $0xc] sm:$0xf]
    %v35 = vld [vmem:[%s3 + $0x10] sm:$0xf]
    %v36 = vld [vmem:[%s3 + $0x14] sm:$0xf]
    %v37 = vld [vmem:[%s3 + $0x18] sm:$0xf]
    %v38 = vld [vmem:[%s3 + $0x1c] sm:$0xf]
    %v39 = vld [vmem:[%s4] sm:$0x1]
    %v40 = vunpack.c.l.bf16 %v39
    %v41 = vld [vmem:[%s5] sm:$0x1]
    %v42 = vld [vmem:[%s0] sm:$0xf]
    %v43 = vld [vmem:[%s0 + $0x4] sm:$0xf]
    %v44 = vld [vmem:[%s0 + $0x8] sm:$0xf]
    %v45 = vld [vmem:[%s0 + $0xc] sm:$0xf]
    %v46 = vld [vmem:[%s0 + $0x10] sm:$0xf]
    %v47 = vld [vmem:[%s0 + $0x14] sm:$0xf]
    %v48 = vld [vmem:[%s0 + $0x18] sm:$0xf]
    %v49 = vld [vmem:[%s0 + $0x1c] sm:$0xf]
    %v50 = vld [vmem:[%s0 + $0x20] sm:$0xf]
    %v51 = vld [vmem:[%s0 + $0x24] sm:$0xf]
    %v52 = vld [vmem:[%s0 + $0x28] sm:$0xf]
    %v53 = vld [vmem:[%s0 + $0x2c] sm:$0xf]
    %v54 = vld [vmem:[%s0 + $0x30] sm:$0xf]
    %v55 = vld [vmem:[%s0 + $0x34] sm:$0xf]
    %v56 = vld [vmem:[%s0 + $0x38] sm:$0xf]
    %v57 = vld [vmem:[%s0 + $0x3c] sm:$0xf]
    %v58 = vlaneseq
    %v59 = vshrl.u32 %v58, 7
    %v60 = vsub.s32 0, %v59
    %v61 = vrot.slane %v30, %v60
    %v78 = vunpack.c.l.b16 %v42
    %v79 = vunpack.c.l.b16 %v43
    %v80 = vunpack.c.l.b16 %v44
    %v81 = vunpack.c.l.b16 %v45
    %v82 = vunpack.c.l.b16 %v46
    %v83 = vunpack.c.l.b16 %v47
    %v84 = vunpack.c.l.b16 %v48
    %v85 = vunpack.c.l.b16 %v49
    %v86 = vunpack.c.l.b16 %v50
    %v87 = vunpack.c.l.b16 %v51
    %v88 = vunpack.c.l.b16 %v52
    %v89 = vunpack.c.l.b16 %v53
    %v90 = vunpack.c.l.b16 %v54
    %v91 = vunpack.c.l.b16 %v55
    %v92 = vunpack.c.l.b16 %v56
    %v93 = vunpack.c.l.b16 %v57
    %v94 = vpack.c.b16 %v79, %v78
    %v95 = vpack.c.b16 %v81, %v80
    %v96 = vpack.c.b16 %v83, %v82
    %v97 = vpack.c.b16 %v85, %v84
    %v98 = vpack.c.b16 %v87, %v86
    %v99 = vpack.c.b16 %v89, %v88
    %v100 = vpack.c.b16 %v91, %v90
    %v101 = vpack.c.b16 %v93, %v92
    %v106 = vunpack.c.l.b16 %v25
    %v107 = vunpack.c.l.b16 %v26
    %v108 = vunpack.c.l.b16 %v27
    %v109 = vunpack.c.l.b16 %v28
    %v110 = vpack.c.b16 %v107, %v106
    %v111 = vpack.c.b16 %v109, %v108
    %vm114 = vcmask 261120
    %v116 = vsel %vm114, %v94, 0
    %v119 = vsel %vm114, %v95, 0
    %v122 = vsel %vm114, %v96, 0
    %v125 = vsel %vm114, %v97, 0
    %v128 = vsel %vm114, %v98, 0
    %v131 = vsel %vm114, %v99, 0
    %v134 = vsel %vm114, %v100, 0
    %v137 = vsel %vm114, %v101, 0
    %139 = vmatprep.subr.bf16.mxu0 0
    %140 = vmatpush1.bf16.msra.mxu0 %v110
    %141 = vmatprep.subr.bf16.mxu0 0
    %142 = vmatpush1.bf16.msra.mxu0 %v111
    %143 = vmatprep.subr.bf16.mxu0 0
    %144 = vmatpush1.bf16.msra.mxu0 0
    %145 = vmatprep.subr.bf16.mxu0 0
    %146 = vmatpush1.bf16.msra.mxu0 0
    %147 = vmatprep.subr.bf16.mxu0 0
    %148 = vmatpush1.bf16.msra.mxu0 0
    %149 = vmatprep.subr.bf16.mxu0 0
    %150 = vmatpush1.bf16.msra.mxu0 0
    %151 = vmatprep.subr.bf16.mxu0 0
    %152 = vmatpush1.bf16.msra.mxu0 0
    %153 = vmatprep.subr.bf16.mxu0 0
    %154 = vmatpush1.bf16.msra.mxu0 0
    %155 = vmatprep.subr.bf16.mxu0 0
    %156 = vmatpush1.bf16.msra.mxu0 0
    %157 = vmatprep.subr.bf16.mxu0 0
    %158 = vmatpush1.bf16.msra.mxu0 0
    %159 = vmatprep.subr.bf16.mxu0 0
    %160 = vmatpush1.bf16.msra.mxu0 0
    %161 = vmatprep.subr.bf16.mxu0 0
    %162 = vmatpush1.bf16.msra.mxu0 0
    %163 = vmatprep.subr.bf16.mxu0 0
    %164 = vmatpush1.bf16.msra.mxu0 0
    %165 = vmatprep.subr.bf16.mxu0 0
    %166 = vmatpush1.bf16.msra.mxu0 0
    %167 = vmatprep.subr.bf16.mxu0 0
    %168 = vmatpush1.bf16.msra.mxu0 0
    %169 = vmatprep.subr.bf16.mxu0 0
    %170 = vmatpush1.bf16.msra.mxu0 0
    %171 = vmatprep.mubr.bf16.mxu0 0
    %172 = vmatmul.mubr.bf16.gmra.mrb[0].mxu0 %v116
    %v173 = vpop.f32.mrb[0].mxu0
    %v174 = vadd.f32 %v61, %v173
    %v175 = vpop.f32.mrb[0].mxu0
    %v176 = vpop.f32.mrb[0].mxu0
    %v177 = vadd.f32 %v61, %v176
    %v178 = vpop.f32.mrb[0].mxu0
    %179 = vmatprep.mubr.bf16.mxu0 0
    %180 = vmatmul.mubr.bf16.gmra.mrb[0].mxu0 %v119
    %v181 = vpop.f32.mrb[0].mxu0
    %v182 = vadd.f32 %v61, %v181
    %v183 = vpop.f32.mrb[0].mxu0
    %v184 = vpop.f32.mrb[0].mxu0
    %v185 = vadd.f32 %v61, %v184
    %v186 = vpop.f32.mrb[0].mxu0
    %187 = vmatprep.mubr.bf16.mxu0 0
    %188 = vmatmul.mubr.bf16.gmra.mrb[0].mxu0 %v122
    %v189 = vpop.f32.mrb[0].mxu0
    %v190 = vadd.f32 %v61, %v189
    %v191 = vpop.f32.mrb[0].mxu0
    %v192 = vpop.f32.mrb[0].mxu0
    %v193 = vadd.f32 %v61, %v192
    %v194 = vpop.f32.mrb[0].mxu0
    %195 = vmatprep.mubr.bf16.mxu0 0
    %196 = vmatmul.mubr.bf16.gmra.mrb[0].mxu0 %v125
    %v197 = vpop.f32.mrb[0].mxu0
    %v198 = vadd.f32 %v61, %v197
    %v199 = vpop.f32.mrb[0].mxu0
    %v200 = vpop.f32.mrb[0].mxu0
    %v201 = vadd.f32 %v61, %v200
    %v202 = vpop.f32.mrb[0].mxu0
    %203 = vmatprep.mubr.bf16.mxu0 0
    %204 = vmatmul.mubr.bf16.gmra.mrb[0].mxu0 %v128
    %v205 = vpop.f32.mrb[0].mxu0
    %v206 = vadd.f32 %v61, %v205
    %v207 = vpop.f32.mrb[0].mxu0
    %v208 = vpop.f32.mrb[0].mxu0
    %v209 = vadd.f32 %v61, %v208
    %v210 = vpop.f32.mrb[0].mxu0
    %211 = vmatprep.mubr.bf16.mxu0 0
    %212 = vmatmul.mubr.bf16.gmra.mrb[0].mxu0 %v131
    %v213 = vpop.f32.mrb[0].mxu0
    %v214 = vadd.f32 %v61, %v213
    %v215 = vpop.f32.mrb[0].mxu0
    %v216 = vpop.f32.mrb[0].mxu0
    %v217 = vadd.f32 %v61, %v216
    %v218 = vpop.f32.mrb[0].mxu0
    %219 = vmatprep.mubr.bf16.mxu0 0
    %220 = vmatmul.mubr.bf16.gmra.mrb[0].mxu0 %v134
    %v221 = vpop.f32.mrb[0].mxu0
    %v222 = vadd.f32 %v61, %v221
    %v223 = vpop.f32.mrb[0].mxu0
    %v224 = vpop.f32.mrb[0].mxu0
    %v225 = vadd.f32 %v61, %v224
    %v226 = vpop.f32.mrb[0].mxu0
    %227 = vmatprep.mubr.bf16.mxu0 0
    %228 = vmatmul.mubr.bf16.gmra.mrb[0].mxu0 %v137
    %v229 = vpop.f32.mrb[0].mxu0
    %v230 = vadd.f32 %v61, %v229
    %v231 = vpop.f32.mrb[0].mxu0
    %v232 = vpop.f32.mrb[0].mxu0
    %v233 = vadd.f32 %v61, %v232
    %v234 = vpop.f32.mrb[0].mxu0
    %235 = vdwg.mxu0
    %v236 = vmax.f32 %v174, 0.0
    %v237 = vmax.f32 %v177, 0.0
    %v238 = vmax.f32 %v182, 0.0
    %v239 = vmax.f32 %v185, 0.0
    %v240 = vmax.f32 %v190, 0.0
    %v241 = vmax.f32 %v193, 0.0
    %v242 = vmax.f32 %v198, 0.0
    %v243 = vmax.f32 %v201, 0.0
    %v244 = vmax.f32 %v206, 0.0
    %v245 = vmax.f32 %v209, 0.0
    %v246 = vmax.f32 %v214, 0.0
    %v247 = vmax.f32 %v217, 0.0
    %v248 = vmax.f32 %v222, 0.0
    %v249 = vmax.f32 %v225, 0.0
    %v250 = vmax.f32 %v230, 0.0
    %v251 = vmax.f32 %v233, 0.0
    %v252 = vpack.c.bf16 %v237, %v236
    %v253 = vpack.c.bf16 %v239, %v238
    %v254 = vpack.c.bf16 %v241, %v240
    %v255 = vpack.c.bf16 %v243, %v242
    %v256 = vpack.c.bf16 %v245, %v244
    %v257 = vpack.c.bf16 %v247, %v246
    %v258 = vpack.c.bf16 %v249, %v248
    %v259 = vpack.c.bf16 %v251, %v250
    %v260 = vlaneseq
    %v261 = vshrl.u32 %v260, 7
    %v262 = vsub.s32 0, %v261
    %v263 = vrot.slane %v40, %v262
    %v272 = vunpack.c.l.b16 %v31
    %v273 = vunpack.c.l.b16 %v32
    %v274 = vunpack.c.l.b16 %v33
    %v275 = vunpack.c.l.b16 %v34
    %v276 = vunpack.c.l.b16 %v35
    %v277 = vunpack.c.l.b16 %v36
    %v278 = vunpack.c.l.b16 %v37
    %v279 = vunpack.c.l.b16 %v38
    %v280 = vpack.c.b16 %v273, %v272
    %v281 = vpack.c.b16 %v275, %v274
    %v282 = vpack.c.b16 %v277, %v276
    %v283 = vpack.c.b16 %v279, %v278
    %vm288 = vcmask 523264
    %v290 = vsel %vm288, %v252, 0
    %v293 = vsel %vm288, %v253, 0
    %v296 = vsel %vm288, %v254, 0
    %v299 = vsel %vm288, %v255, 0
    %v302 = vsel %vm288, %v256, 0
    %v305 = vsel %vm288, %v257, 0
    %v308 = vsel %vm288, %v258, 0
    %v311 = vsel %vm288, %v259, 0
    %313 = vmatprep.subr.bf16.mxu0 0
    %314 = vmatpush1.bf16.msra.mxu0 %v280
    %315 = vmatprep.subr.bf16.mxu0 0
    %316 = vmatpush1.bf16.msra.mxu0 %v281
    %317 = vmatprep.subr.bf16.mxu0 0
    %318 = vmatpush1.bf16.msra.mxu0 %v282
    %319 = vmatprep.subr.bf16.mxu0 0
    %320 = vmatpush1.bf16.msra.mxu0 %v283
    %321 = vmatprep.subr.bf16.mxu0 0
    %322 = vmatpush1.bf16.msra.mxu0 0
    %323 = vmatprep.subr.bf16.mxu0 0
    %324 = vmatpush1.bf16.msra.mxu0 0
    %325 = vmatprep.subr.bf16.mxu0 0
    %326 = vmatpush1.bf16.msra.mxu0 0
    %327 = vmatprep.subr.bf16.mxu0 0
    %328 = vmatpush1.bf16.msra.mxu0 0
    %329 = vmatprep.subr.bf16.mxu0 0
    %330 = vmatpush1.bf16.msra.mxu0 0
    %331 = vmatprep.subr.bf16.mxu0 0
    %332 = vmatpush1.bf16.msra.mxu0 0
    %333 = vmatprep.subr.bf16.mxu0 0
    %334 = vmatpush1.bf16.msra.mxu0 0
    %335 = vmatprep.subr.bf16.mxu0 0
    %336 = vmatpush1.bf16.msra.mxu0 0
    %337 = vmatprep.subr.bf16.mxu0 0
    %338 = vmatpush1.bf16.msra.mxu0 0
    %339 = vmatprep.subr.bf16.mxu0 0
    %340 = vmatpush1.bf16.msra.mxu0 0
    %341 = vmatprep.subr.bf16.mxu0 0
    %342 = vmatpush1.bf16.msra.mxu0 0
    %343 = vmatprep.subr.bf16.mxu0 0
    %344 = vmatpush1.bf16.msra.mxu0 0
    %345 = vmatprep.mubr.bf16.mxu0 0
    %346 = vmatmul.mubr.bf16.gmra.mrb[0].mxu0 %v290
    %v347 = vpop.f32.mrb[0].mxu0
    %v348 = vadd.f32 %v263, %v347
    %v349 = vpop.f32.mrb[0].mxu0
    %v350 = vpop.f32.mrb[0].mxu0
    %v351 = vadd.f32 %v263, %v350
    %v352 = vpop.f32.mrb[0].mxu0
    %353 = vmatprep.mubr.bf16.mxu0 0
    %354 = vmatmul.mubr.bf16.gmra.mrb[0].mxu0 %v293
    %v355 = vpop.f32.mrb[0].mxu0
    %v356 = vadd.f32 %v263, %v355
    %v357 = vpop.f32.mrb[0].mxu0
    %v358 = vpop.f32.mrb[0].mxu0
    %v359 = vadd.f32 %v263, %v358
    %v360 = vpop.f32.mrb[0].mxu0
    %361 = vmatprep.mubr.bf16.mxu0 0
    %362 = vmatmul.mubr.bf16.gmra.mrb[0].mxu0 %v296
    %v363 = vpop.f32.mrb[0].mxu0
    %v364 = vadd.f32 %v263, %v363
    %v365 = vpop.f32.mrb[0].mxu0
    %v366 = vpop.f32.mrb[0].mxu0
    %v367 = vadd.f32 %v263, %v366
    %v368 = vpop.f32.mrb[0].mxu0
    %369 = vmatprep.mubr.bf16.mxu0 0
    %370 = vmatmul.mubr.bf16.gmra.mrb[0].mxu0 %v299
    %v371 = vpop.f32.mrb[0].mxu0
    %v372 = vadd.f32 %v263, %v371
    %v373 = vpop.f32.mrb[0].mxu0
    %v374 = vpop.f32.mrb[0].mxu0
    %v375 = vadd.f32 %v263, %v374
    %v376 = vpop.f32.mrb[0].mxu0
    %377 = vmatprep.mubr.bf16.mxu0 0
    %378 = vmatmul.mubr.bf16.gmra.mrb[0].mxu0 %v302
    %v379 = vpop.f32.mrb[0].mxu0
    %v380 = vadd.f32 %v263, %v379
    %v381 = vpop.f32.mrb[0].mxu0
    %v382 = vpop.f32.mrb[0].mxu0
    %v383 = vadd.f32 %v263, %v382
    %v384 = vpop.f32.mrb[0].mxu0
    %385 = vmatprep.mubr.bf16.mxu0 0
    %386 = vmatmul.mubr.bf16.gmra.mrb[0].mxu0 %v305
    %v387 = vpop.f32.mrb[0].mxu0
    %v388 = vadd.f32 %v263, %v387
    %v389 = vpop.f32.mrb[0].mxu0
    %v390 = vpop.f32.mrb[0].mxu0
    %v391 = vadd.f32 %v263, %v390
    %v392 = vpop.f32.mrb[0].mxu0
    %393 = vmatprep.mubr.bf16.mxu0 0
    %394 = vmatmul.mubr.bf16.gmra.mrb[0].mxu0 %v308
    %v395 = vpop.f32.mrb[0].mxu0
    %v396 = vadd.f32 %v263, %v395
    %v397 = vpop.f32.mrb[0].mxu0
    %v398 = vpop.f32.mrb[0].mxu0
    %v399 = vadd.f32 %v263, %v398
    %v400 = vpop.f32.mrb[0].mxu0
    %401 = vmatprep.mubr.bf16.mxu0 0
    %402 = vmatmul.mubr.bf16.gmra.mrb[0].mxu0 %v311
    %v403 = vpop.f32.mrb[0].mxu0
    %v404 = vadd.f32 %v263, %v403
    %v405 = vpop.f32.mrb[0].mxu0
    %v406 = vpop.f32.mrb[0].mxu0
    %v407 = vadd.f32 %v263, %v406
    %v408 = vpop.f32.mrb[0].mxu0
    %409 = vdwg.mxu0
    %v410 = vmax.f32 %v348, 0.0
    %v411 = vmax.f32 %v351, 0.0
    %v412 = vmax.f32 %v356, 0.0
    %v413 = vmax.f32 %v359, 0.0
    %v414 = vmax.f32 %v364, 0.0
    %v415 = vmax.f32 %v367, 0.0
    %v416 = vmax.f32 %v372, 0.0
    %v417 = vmax.f32 %v375, 0.0
    %v418 = vmax.f32 %v380, 0.0
    %v419 = vmax.f32 %v383, 0.0
    %v420 = vmax.f32 %v388, 0.0
    %v421 = vmax.f32 %v391, 0.0
    %v422 = vmax.f32 %v396, 0.0
    %v423 = vmax.f32 %v399, 0.0
    %v424 = vmax.f32 %v404, 0.0
    %v425 = vmax.f32 %v407, 0.0
    %426 = vxpose.xlu0.b32.start [1/16] %v410, 128
    %427 = vxpose.xlu0.b32.cont [2/16] %v411, 128
    %428 = vxpose.xlu0.b32.cont [3/16] %v412, 128
    %429 = vxpose.xlu0.b32.cont [4/16] %v413, 128
    %430 = vxpose.xlu0.b32.cont [5/16] %v414, 128
    %431 = vxpose.xlu0.b32.cont [6/16] %v415, 128
    %432 = vxpose.xlu0.b32.cont [7/16] %v416, 128
    %433 = vxpose.xlu0.b32.cont [8/16] %v417, 128
    %434 = vxpose.xlu0.b32.cont [9/16] %v418, 128
    %435 = vxpose.xlu0.b32.cont [10/16] %v419, 128
    %436 = vxpose.xlu0.b32.cont [11/16] %v420, 128
    %437 = vxpose.xlu0.b32.cont [12/16] %v421, 128
    %438 = vxpose.xlu0.b32.cont [13/16] %v422, 128
    %439 = vxpose.xlu0.b32.cont [14/16] %v423, 128
    %440 = vxpose.xlu0.b32.cont [15/16] %v424, 128
    %441 = vxpose.xlu0.b32.end [16/16] %v425, 128
    %v442 = vpop.trf.xlu0
    %v443 = vpop.trf.xlu0
    %v444 = vpop.trf.xlu0
    %v445 = vpop.trf.xlu0
    %v446 = vpop.trf.xlu0
    %v447 = vpop.trf.xlu0
    %v448 = vpop.trf.xlu0
    %v449 = vpop.trf.xlu0
    %v450 = vpop.trf.xlu0
    %v451 = vpop.trf.xlu0
    %v452 = vpop.trf.xlu0
    %v453 = vpop.trf.xlu0
    %v454 = vpop.trf.xlu0
    %v455 = vpop.trf.xlu0
    %v456 = vpop.trf.xlu0
    %v457 = vpop.trf.xlu0
    %v458 = vpack.c.bf16 %v443, %v442
    %v459 = vpack.c.bf16 %v445, %v444
    %v460 = vpack.c.bf16 %v447, %v446
    %v461 = vpack.c.bf16 %v449, %v448
    %v463 = vsel %vm288, %v41, 0
    %465 = vmatprep.subr.bf16.mxu0 0
    %466 = vmatpush1.bf16.msra.mxu0 %v458
    %467 = vmatprep.subr.bf16.mxu0 0
    %468 = vmatpush1.bf16.msra.mxu0 %v459
    %469 = vmatprep.subr.bf16.mxu0 0
    %470 = vmatpush1.bf16.msra.mxu0 %v460
    %471 = vmatprep.subr.bf16.mxu0 0
    %472 = vmatpush1.bf16.msra.mxu0 %v461
    %473 = vmatprep.subr.bf16.mxu0 0
    %474 = vmatpush1.bf16.msra.mxu0 0
    %475 = vmatprep.subr.bf16.mxu0 0
    %476 = vmatpush1.bf16.msra.mxu0 0
    %477 = vmatprep.subr.bf16.mxu0 0
    %478 = vmatpush1.bf16.msra.mxu0 0
    %479 = vmatprep.subr.bf16.mxu0 0
    %480 = vmatpush1.bf16.msra.mxu0 0
    %481 = vmatprep.subr.bf16.mxu0 0
    %482 = vmatpush1.bf16.msra.mxu0 0
    %483 = vmatprep.subr.bf16.mxu0 0
    %484 = vmatpush1.bf16.msra.mxu0 0
    %485 = vmatprep.subr.bf16.mxu0 0
    %486 = vmatpush1.bf16.msra.mxu0 0
    %487 = vmatprep.subr.bf16.mxu0 0
    %488 = vmatpush1.bf16.msra.mxu0 0
    %489 = vmatprep.subr.bf16.mxu0 0
    %490 = vmatpush1.bf16.msra.mxu0 0
    %491 = vmatprep.subr.bf16.mxu0 0
    %492 = vmatpush1.bf16.msra.mxu0 0
    %493 = vmatprep.subr.bf16.mxu0 0
    %494 = vmatpush1.bf16.msra.mxu0 0
    %495 = vmatprep.subr.bf16.mxu0 0
    %496 = vmatpush1.bf16.msra.mxu0 0
    %497 = vmatprep.mubr.bf16.mxu0 0
    %498 = vmatmul.mubr.bf16.gmra.mrb[0].mxu0 %v463
    %v499 = vpop.f32.mrb[0].mxu0
    %v500 = vadd.f32 0.0, %v499
    %v501 = vpop.f32.mrb[0].mxu0
    %v502 = vpop.f32.mrb[0].mxu0
    %v503 = vpop.f32.mrb[0].mxu0
    %504 = vdwg.mxu0
    %505 = vst [vmem:[#allocation2] sm:$0x1] %v500
    // Predicated region
    $region26: #{tpu_custom_call.1} parent=1 // pred_check
      _
    $region27: #{tpu_custom_call.1} parent=1 // pred_check_branch
      %507 = sbr.rel (0) target = $region29
    $region28: #{tpu_custom_call.1} parent=1 // pred_region
      %s509 = ssub.s32 16, 16
      %510 = vsyncadd [#allocation3], %s509
      %s512 = sshll.u32 [#allocation2], 4
      %s513 = int_to_ptr.vmem [resolvable:$true] %s512
      %515 = dma.vmem_to_hbm [thread:$0]  %s513, 16, %s6, [#allocation3]
    $region29: #{tpu_custom_call.1} parent=1 // pred_fallthru
      _
    // Predicated region
    $region30: #{tpu_custom_call.1} parent=1 // pred_check
      _
    $region31: #{tpu_custom_call.1} parent=1 // pred_check_branch
      %517 = sbr.rel (0) target = $region33
    $region32: #{tpu_custom_call.1} parent=1 // pred_region
      %518 = dma.done [#allocation3], 16
    $region33: #{tpu_custom_call.1} parent=1 // pred_fallthru
      _
    %519 = vsyncpa [#allocation3], 1

</llo_original>
